<compile_context>
chip_gen: v6e
topology: v6e:2x2x1
jax: 0.10.0
libtpu: 0.0.40
codegen_flags: <defaults>
</compile_context>

<pallas_src>
from functools import partial
from itertools import permutations

import jax
import jax.numpy as jnp
from jax.experimental import pallas as pl
from jax.experimental.pallas import tpu as pltpu

N_TRACKS = 3
# Ordering is irrelevant because we take a min over the permutation axis.
PERMS = tuple(permutations(range(N_TRACKS)))      # 6 static permutations
N_PAIRS = N_TRACKS * N_TRACKS                     # 9 unique (est, label) pairs


def _round_up(v, m):
    return ((v + m - 1) // m) * m


def _make_kernel(t_real):
    """Kernel factory; t_real is the un-padded time length (static)."""
    inv = 1.0 / float(N_TRACKS * t_real)

    def kernel(x_ref, y_ref, o_ref, pair_acc_ref):
        # grid = (bd_block [parallel], t_block [arbitrary/reduction])
        t_idx = pl.program_id(1)

        @pl.when(t_idx == 0)
        def _init():
            pair_acc_ref[...] = jnp.zeros_like(pair_acc_ref)

        x = x_ref[...].astype(jnp.float32)        # (n, t_tile, bd_tile)
        y = y_ref[...].astype(jnp.float32)        # (n, t_tile, bd_tile)

        # 9 unique pairwise time-summed squared-error maps, computed once and
        # reused by all 6 permutations (instead of 18 redundant passes).
        partials = []
        for i in range(N_TRACKS):                 # estimate track
            xi = x[i]
            for j in range(N_TRACKS):             # label track
                d = xi - y[j]                               # (t_tile, bd_tile)
                partials.append(jnp.sum(d * d, axis=0, keepdims=True))
        pair_acc_ref[...] += jnp.concatenate(partials, axis=0)   # (9, bd_tile)

        @pl.when(t_idx == pl.num_programs(1) - 1)
        def _finalize():
            best = None
            for perm in PERMS:                    # incremental running minimum
                score = (pair_acc_ref[pl.ds(perm[0] * N_TRACKS + 0, 1), :]
                         + pair_acc_ref[pl.ds(perm[1] * N_TRACKS + 1, 1), :]
                         + pair_acc_ref[pl.ds(perm[2] * N_TRACKS + 2, 1), :])
                best = score if best is None else jnp.minimum(best, score)
            # mean over (track, time) == sum * 1/(n*T); padded time rows add 0.
            o_ref[...] = best * inv

    return kernel


@partial(jax.jit, static_argnames=("t_tile", "bd_tile"))
def pit_loss(x, y, *, t_tile=256, bd_tile=512):
    """PIT loss matching PITLoss.forward for (B, n, T, D) inputs, n == 3."""
    B, n, T, D = x.shape
    assert n == N_TRACKS, "kernel is specialized for n=3 tracks"
    BD = B * D

    # Lane-dense layout: (B, n, T, D) -> (n, T, B*D).  Pure layout plumbing.
    def relayout(a):
        return jnp.transpose(a, (1, 2, 0, 3)).reshape(n, T, BD)

    xr, yr = relayout(x), relayout(y)

    # Tile sizes: respect the (8, 128) block constraint; keep tiles small
    # enough that 2 inputs x 2 pipeline buffers fit every chip's default
    # scoped VMEM (v5e 16 MiB / v6e 32 MiB / v7x 32 MiB).
    t_pad8 = _round_up(T, 8)
    tt = t_pad8 if t_pad8 <= t_tile else t_tile
    T_pad = _round_up(t_pad8, tt)

    bd_pad128 = _round_up(BD, 128)
    bt = bd_pad128 if bd_pad128 <= bd_tile else bd_tile
    BD_pad = _round_up(bd_pad128, bt)

    if (T_pad, BD_pad) != (T, BD):
        pad = ((0, 0), (0, T_pad - T), (0, BD_pad - BD))
        xr = jnp.pad(xr, pad)        # zero padding contributes 0 to every pair
        yr = jnp.pad(yr, pad)

    grid = (BD_pad // bt, T_pad // tt)    # (parallel lane blocks, time reduce)

    out = pl.pallas_call(
        _make_kernel(T),
        out_shape=jax.ShapeDtypeStruct((1, BD_pad), jnp.float32),
        grid_spec=pltpu.PrefetchScalarGridSpec(
            num_scalar_prefetch=0,
            grid=grid,
            in_specs=[
                pl.BlockSpec((N_TRACKS, tt, bt), lambda i, t: (0, t, i)),
                pl.BlockSpec((N_TRACKS, tt, bt), lambda i, t: (0, t, i)),
            ],
            out_specs=pl.BlockSpec((1, bt), lambda i, t: (0, i)),
            scratch_shapes=[pltpu.VMEM((N_PAIRS, bt), jnp.float32)],
        ),
        compiler_params=pltpu.CompilerParams(
            dimension_semantics=("parallel", "arbitrary"),
        ),
    )(xr, yr)

    best = out[0, :BD]               # drop zero-padded lanes
    # torch: mean over D -> (B,), then mean over B  ==  mean over all (B, D).
    return jnp.mean(best)


def _pit_loss_ref(x, y):
    """Pure-JAX reference mirroring the PyTorch forward exactly."""
    perms = jnp.asarray(PERMS)                            # (P, n)
    accdoa_perms = x[:, perms, :, :]                      # (B, P, n, T, D)
    expanded_labels = y[:, None, :, :, :]                 # (B, 1, n, T, D)
    mse_perms = (accdoa_perms - expanded_labels) ** 2
    mse_perms_average = jnp.mean(mse_perms, axis=(2, 3))  # (B, P, D)
    best = jnp.min(mse_perms_average, axis=1)             # (B, D)
    pit = jnp.mean(best, axis=-1)                         # (B,)
    return jnp.mean(pit)


if __name__ == "__main__":
    key = jax.random.PRNGKey(0)

    # Small shape consistent with the module: (batch, tracks, time, 3*classes).
    B, n, T, D = 2, N_TRACKS, 8, 12
    k1, k2, k3, k4 = jax.random.split(key, 4)
    x = jax.random.normal(k1, (B, n, T, D), dtype=jnp.float32)
    y = jax.random.normal(k2, (B, n, T, D), dtype=jnp.float32)
    out = jax.block_until_ready(pit_loss(x, y))
    ref = _pit_loss_ref(x, y)
    assert jnp.allclose(out, ref, atol=1e-5, rtol=1e-5), (out, ref)

    # Second small case with deliberately tiny tiles to exercise lane padding,
    # the multi-block "parallel" lane grid and the time-reduction accumulator.
    B2, T2, D2 = 4, 24, 36
    x2 = jax.random.normal(k3, (B2, n, T2, D2), dtype=jnp.float32)
    y2 = jax.random.normal(k4, (B2, n, T2, D2), dtype=jnp.float32)
    out2 = jax.block_until_ready(pit_loss(x2, y2, t_tile=8, bd_tile=128))
    ref2 = _pit_loss_ref(x2, y2)
    assert jnp.allclose(out2, ref2, atol=1e-5, rtol=1e-5), (out2, ref2)

    print("KERNEL_OK")
</pallas_src>

<mosaic_0001>
module attributes {stable_mosaic.version = 11 : i64} {
  func.func @kernel(%arg0: i32, %arg1: i32, %arg2: memref<3x8x128xf32, #tpu.memory_space<vmem>>, %arg3: memref<3x8x128xf32, #tpu.memory_space<vmem>>, %arg4: memref<1x128xf32, #tpu.memory_space<vmem>>, %arg5: memref<9x128xf32, #tpu.memory_space<vmem>>) attributes {dimension_semantics = [#tpu.dimension_semantics<parallel>, #tpu.dimension_semantics<arbitrary>], iteration_bounds = array<i64: 1, 1>, scalar_prefetch = 0 : i64, scratch_operands = 1 : i64, tpu.core_type = #tpu.core_type<tc>, window_params = [{transform_indices = @transform_0, window_bounds = array<i64: 3, 8, 128>}, {transform_indices = @transform_1, window_bounds = array<i64: 3, 8, 128>}, {transform_indices = @transform_2, window_bounds = array<i64: 1, 128>}]} {
    %c0_i32 = arith.constant 0 : i32
    %0 = arith.cmpi eq, %arg1, %c0_i32 : i32
    %1 = arith.extui %0 : i1 to i32
    %c0_i32_0 = arith.constant 0 : i32
    %2 = arith.cmpi ne, %1, %c0_i32_0 : i32
    scf.if %2 {
      %cst_20 = arith.constant 0.000000e+00 : f32
      %72 = vector.broadcast %cst_20 : f32 to vector<9x128xf32>
      %c0_21 = arith.constant 0 : index
      %c0_22 = arith.constant 0 : index
      %73 = vector.load %arg5[%c0_21, %c0_22] : memref<9x128xf32, #tpu.memory_space<vmem>>, vector<9x128xf32>
      tpu.vector_store %arg5[%c0_21, %c0_22], %72 {strides = array<i32>} : memref<9x128xf32, #tpu.memory_space<vmem>>, vector<9x128xf32>,
    } else {
    }
    %c0 = arith.constant 0 : index
    %c0_1 = arith.constant 0 : index
    %c0_2 = arith.constant 0 : index
    %3 = vector.load %arg2[%c0, %c0_1, %c0_2] : memref<3x8x128xf32, #tpu.memory_space<vmem>>, vector<3x8x128xf32>
    %c0_3 = arith.constant 0 : index
    %c0_4 = arith.constant 0 : index
    %c0_5 = arith.constant 0 : index
    %4 = vector.load %arg3[%c0_3, %c0_4, %c0_5] : memref<3x8x128xf32, #tpu.memory_space<vmem>>, vector<3x8x128xf32>
    %5 = vector.extract_strided_slice %3 {offsets = [0, 0, 0], sizes = [1, 8, 128], strides = [1, 1, 1]} : vector<3x8x128xf32> to vector<1x8x128xf32>
    %6 = vector.shape_cast %5 : vector<1x8x128xf32> to vector<8x128xf32>
    %7 = vector.extract_strided_slice %4 {offsets = [0, 0, 0], sizes = [1, 8, 128], strides = [1, 1, 1]} : vector<3x8x128xf32> to vector<1x8x128xf32>
    %8 = vector.shape_cast %7 : vector<1x8x128xf32> to vector<8x128xf32>
    %9 = arith.subf %6, %8 : vector<8x128xf32>
    %10 = arith.mulf %9, %9 : vector<8x128xf32>
    %cst = arith.constant dense<0.000000e+00> : vector<128xf32>
    %11 = vector.multi_reduction <add>, %10, %cst [0] : vector<8x128xf32> to vector<128xf32>
    %12 = vector.shape_cast %11 : vector<128xf32> to vector<1x128xf32>
    %13 = vector.extract_strided_slice %4 {offsets = [1, 0, 0], sizes = [1, 8, 128], strides = [1, 1, 1]} : vector<3x8x128xf32> to vector<1x8x128xf32>
    %14 = vector.shape_cast %13 : vector<1x8x128xf32> to vector<8x128xf32>
    %15 = arith.subf %6, %14 : vector<8x128xf32>
    %16 = arith.mulf %15, %15 : vector<8x128xf32>
    %cst_6 = arith.constant dense<0.000000e+00> : vector<128xf32>
    %17 = vector.multi_reduction <add>, %16, %cst_6 [0] : vector<8x128xf32> to vector<128xf32>
    %18 = vector.shape_cast %17 : vector<128xf32> to vector<1x128xf32>
    %19 = vector.extract_strided_slice %4 {offsets = [2, 0, 0], sizes = [1, 8, 128], strides = [1, 1, 1]} : vector<3x8x128xf32> to vector<1x8x128xf32>
    %20 = vector.shape_cast %19 : vector<1x8x128xf32> to vector<8x128xf32>
    %21 = arith.subf %6, %20 : vector<8x128xf32>
    %22 = arith.mulf %21, %21 : vector<8x128xf32>
    %cst_7 = arith.constant dense<0.000000e+00> : vector<128xf32>
    %23 = vector.multi_reduction <add>, %22, %cst_7 [0] : vector<8x128xf32> to vector<128xf32>
    %24 = vector.shape_cast %23 : vector<128xf32> to vector<1x128xf32>
    %25 = vector.extract_strided_slice %3 {offsets = [1, 0, 0], sizes = [1, 8, 128], strides = [1, 1, 1]} : vector<3x8x128xf32> to vector<1x8x128xf32>
    %26 = vector.shape_cast %25 : vector<1x8x128xf32> to vector<8x128xf32>
    %27 = vector.extract_strided_slice %4 {offsets = [0, 0, 0], sizes = [1, 8, 128], strides = [1, 1, 1]} : vector<3x8x128xf32> to vector<1x8x128xf32>
    %28 = vector.shape_cast %27 : vector<1x8x128xf32> to vector<8x128xf32>
    %29 = arith.subf %26, %28 : vector<8x128xf32>
    %30 = arith.mulf %29, %29 : vector<8x128xf32>
    %cst_8 = arith.constant dense<0.000000e+00> : vector<128xf32>
    %31 = vector.multi_reduction <add>, %30, %cst_8 [0] : vector<8x128xf32> to vector<128xf32>
    %32 = vector.shape_cast %31 : vector<128xf32> to vector<1x128xf32>
    %33 = vector.extract_strided_slice %4 {offsets = [1, 0, 0], sizes = [1, 8, 128], strides = [1, 1, 1]} : vector<3x8x128xf32> to vector<1x8x128xf32>
    %34 = vector.shape_cast %33 : vector<1x8x128xf32> to vector<8x128xf32>
    %35 = arith.subf %26, %34 : vector<8x128xf32>
    %36 = arith.mulf %35, %35 : vector<8x128xf32>
    %cst_9 = arith.constant dense<0.000000e+00> : vector<128xf32>
    %37 = vector.multi_reduction <add>, %36, %cst_9 [0] : vector<8x128xf32> to vector<128xf32>
    %38 = vector.shape_cast %37 : vector<128xf32> to vector<1x128xf32>
    %39 = vector.extract_strided_slice %4 {offsets = [2, 0, 0], sizes = [1, 8, 128], strides = [1, 1, 1]} : vector<3x8x128xf32> to vector<1x8x128xf32>
    %40 = vector.shape_cast %39 : vector<1x8x128xf32> to vector<8x128xf32>
    %41 = arith.subf %26, %40 : vector<8x128xf32>
    %42 = arith.mulf %41, %41 : vector<8x128xf32>
    %cst_10 = arith.constant dense<0.000000e+00> : vector<128xf32>
    %43 = vector.multi_reduction <add>, %42, %cst_10 [0] : vector<8x128xf32> to vector<128xf32>
    %44 = vector.shape_cast %43 : vector<128xf32> to vector<1x128xf32>
    %45 = vector.extract_strided_slice %3 {offsets = [2, 0, 0], sizes = [1, 8, 128], strides = [1, 1, 1]} : vector<3x8x128xf32> to vector<1x8x128xf32>
    %46 = vector.shape_cast %45 : vector<1x8x128xf32> to vector<8x128xf32>
    %47 = vector.extract_strided_slice %4 {offsets = [0, 0, 0], sizes = [1, 8, 128], strides = [1, 1, 1]} : vector<3x8x128xf32> to vector<1x8x128xf32>
    %48 = vector.shape_cast %47 : vector<1x8x128xf32> to vector<8x128xf32>
    %49 = arith.subf %46, %48 : vector<8x128xf32>
    %50 = arith.mulf %49, %49 : vector<8x128xf32>
    %cst_11 = arith.constant dense<0.000000e+00> : vector<128xf32>
    %51 = vector.multi_reduction <add>, %50, %cst_11 [0] : vector<8x128xf32> to vector<128xf32>
    %52 = vector.shape_cast %51 : vector<128xf32> to vector<1x128xf32>
    %53 = vector.extract_strided_slice %4 {offsets = [1, 0, 0], sizes = [1, 8, 128], strides = [1, 1, 1]} : vector<3x8x128xf32> to vector<1x8x128xf32>
    %54 = vector.shape_cast %53 : vector<1x8x128xf32> to vector<8x128xf32>
    %55 = arith.subf %46, %54 : vector<8x128xf32>
    %56 = arith.mulf %55, %55 : vector<8x128xf32>
    %cst_12 = arith.constant dense<0.000000e+00> : vector<128xf32>
    %57 = vector.multi_reduction <add>, %56, %cst_12 [0] : vector<8x128xf32> to vector<128xf32>
    %58 = vector.shape_cast %57 : vector<128xf32> to vector<1x128xf32>
    %59 = vector.extract_strided_slice %4 {offsets = [2, 0, 0], sizes = [1, 8, 128], strides = [1, 1, 1]} : vector<3x8x128xf32> to vector<1x8x128xf32>
    %60 = vector.shape_cast %59 : vector<1x8x128xf32> to vector<8x128xf32>
    %61 = arith.subf %46, %60 : vector<8x128xf32>
    %62 = arith.mulf %61, %61 : vector<8x128xf32>
    %cst_13 = arith.constant dense<0.000000e+00> : vector<128xf32>
    %63 = vector.multi_reduction <add>, %62, %cst_13 [0] : vector<8x128xf32> to vector<128xf32>
    %64 = vector.shape_cast %63 : vector<128xf32> to vector<1x128xf32>
    %c0_14 = arith.constant 0 : index
    %c0_15 = arith.constant 0 : index
    %65 = vector.load %arg5[%c0_14, %c0_15] : memref<9x128xf32, #tpu.memory_space<vmem>>, vector<9x128xf32>
    %66 = tpu.concatenate %12, %18, %24, %32, %38, %44, %52, %58, %64 in 0 : vector<1x128xf32>, vector<1x128xf32>, vector<1x128xf32>, vector<1x128xf32>, vector<1x128xf32>, vector<1x128xf32>, vector<1x128xf32>, vector<1x128xf32>, vector<1x128xf32> -> vector<9x128xf32>
    %67 = arith.addf %65, %66 : vector<9x128xf32>
    %c0_16 = arith.constant 0 : index
    %c0_17 = arith.constant 0 : index
    %68 = vector.load %arg5[%c0_16, %c0_17] : memref<9x128xf32, #tpu.memory_space<vmem>>, vector<9x128xf32>
    tpu.vector_store %arg5[%c0_16, %c0_17], %67 {strides = array<i32>} : memref<9x128xf32, #tpu.memory_space<vmem>>, vector<9x128xf32>,
    %c0_i32_18 = arith.constant 0 : i32
    %69 = arith.cmpi eq, %arg1, %c0_i32_18 : i32
    %70 = arith.extui %69 : i1 to i32
    %c0_i32_19 = arith.constant 0 : i32
    %71 = arith.cmpi ne, %70, %c0_i32_19 : i32
    scf.if %71 {
      %c0_20 = arith.constant 0 : index
      %c0_21 = arith.constant 0 : index
      %72 = vector.load %arg5[%c0_20, %c0_21] : memref<9x128xf32, #tpu.memory_space<vmem>>, vector<1x128xf32>
      %c4 = arith.constant 4 : index
      %c0_22 = arith.constant 0 : index
      %73 = vector.load %arg5[%c4, %c0_22] : memref<9x128xf32, #tpu.memory_space<vmem>>, vector<1x128xf32>
      %74 = arith.addf %72, %73 : vector<1x128xf32>
      %c8 = arith.constant 8 : index
      %c0_23 = arith.constant 0 : index
      %75 = vector.load %arg5[%c8, %c0_23] : memref<9x128xf32, #tpu.memory_space<vmem>>, vector<1x128xf32>
      %76 = arith.addf %74, %75 : vector<1x128xf32>
      %c0_24 = arith.constant 0 : index
      %c0_25 = arith.constant 0 : index
      %77 = vector.load %arg5[%c0_24, %c0_25] : memref<9x128xf32, #tpu.memory_space<vmem>>, vector<1x128xf32>
      %c7 = arith.constant 7 : index
      %c0_26 = arith.constant 0 : index
      %78 = vector.load %arg5[%c7, %c0_26] : memref<9x128xf32, #tpu.memory_space<vmem>>, vector<1x128xf32>
      %79 = arith.addf %77, %78 : vector<1x128xf32>
      %c5 = arith.constant 5 : index
      %c0_27 = arith.constant 0 : index
      %80 = vector.load %arg5[%c5, %c0_27] : memref<9x128xf32, #tpu.memory_space<vmem>>, vector<1x128xf32>
      %81 = arith.addf %79, %80 : vector<1x128xf32>
      %82 = arith.minimumf %76, %81 : vector<1x128xf32>
      %c3 = arith.constant 3 : index
      %c0_28 = arith.constant 0 : index
      %83 = vector.load %arg5[%c3, %c0_28] : memref<9x128xf32, #tpu.memory_space<vmem>>, vector<1x128xf32>
      %c1 = arith.constant 1 : index
      %c0_29 = arith.constant 0 : index
      %84 = vector.load %arg5[%c1, %c0_29] : memref<9x128xf32, #tpu.memory_space<vmem>>, vector<1x128xf32>
      %85 = arith.addf %83, %84 : vector<1x128xf32>
      %c8_30 = arith.constant 8 : index
      %c0_31 = arith.constant 0 : index
      %86 = vector.load %arg5[%c8_30, %c0_31] : memref<9x128xf32, #tpu.memory_space<vmem>>, vector<1x128xf32>
      %87 = arith.addf %85, %86 : vector<1x128xf32>
      %88 = arith.minimumf %82, %87 : vector<1x128xf32>
      %c3_32 = arith.constant 3 : index
      %c0_33 = arith.constant 0 : index
      %89 = vector.load %arg5[%c3_32, %c0_33] : memref<9x128xf32, #tpu.memory_space<vmem>>, vector<1x128xf32>
      %c7_34 = arith.constant 7 : index
      %c0_35 = arith.constant 0 : index
      %90 = vector.load %arg5[%c7_34, %c0_35] : memref<9x128xf32, #tpu.memory_space<vmem>>, vector<1x128xf32>
      %91 = arith.addf %89, %90 : vector<1x128xf32>
      %c2 = arith.constant 2 : index
      %c0_36 = arith.constant 0 : index
      %92 = vector.load %arg5[%c2, %c0_36] : memref<9x128xf32, #tpu.memory_space<vmem>>, vector<1x128xf32>
      %93 = arith.addf %91, %92 : vector<1x128xf32>
      %94 = arith.minimumf %88, %93 : vector<1x128xf32>
      %c6 = arith.constant 6 : index
      %c0_37 = arith.constant 0 : index
      %95 = vector.load %arg5[%c6, %c0_37] : memref<9x128xf32, #tpu.memory_space<vmem>>, vector<1x128xf32>
      %c1_38 = arith.constant 1 : index
      %c0_39 = arith.constant 0 : index
      %96 = vector.load %arg5[%c1_38, %c0_39] : memref<9x128xf32, #tpu.memory_space<vmem>>, vector<1x128xf32>
      %97 = arith.addf %95, %96 : vector<1x128xf32>
      %c5_40 = arith.constant 5 : index
      %c0_41 = arith.constant 0 : index
      %98 = vector.load %arg5[%c5_40, %c0_41] : memref<9x128xf32, #tpu.memory_space<vmem>>, vector<1x128xf32>
      %99 = arith.addf %97, %98 : vector<1x128xf32>
      %100 = arith.minimumf %94, %99 : vector<1x128xf32>
      %c6_42 = arith.constant 6 : index
      %c0_43 = arith.constant 0 : index
      %101 = vector.load %arg5[%c6_42, %c0_43] : memref<9x128xf32, #tpu.memory_space<vmem>>, vector<1x128xf32>
      %c4_44 = arith.constant 4 : index
      %c0_45 = arith.constant 0 : index
      %102 = vector.load %arg5[%c4_44, %c0_45] : memref<9x128xf32, #tpu.memory_space<vmem>>, vector<1x128xf32>
      %103 = arith.addf %101, %102 : vector<1x128xf32>
      %c2_46 = arith.constant 2 : index
      %c0_47 = arith.constant 0 : index
      %104 = vector.load %arg5[%c2_46, %c0_47] : memref<9x128xf32, #tpu.memory_space<vmem>>, vector<1x128xf32>
      %105 = arith.addf %103, %104 : vector<1x128xf32>
      %106 = arith.minimumf %100, %105 : vector<1x128xf32>
      %cst_48 = arith.constant 0.0416666679 : f32
      %107 = vector.broadcast %cst_48 : f32 to vector<1x128xf32>
      %108 = arith.mulf %106, %107 : vector<1x128xf32>
      %c0_49 = arith.constant 0 : index
      %c0_50 = arith.constant 0 : index
      %109 = vector.load %arg4[%c0_49, %c0_50] : memref<1x128xf32, #tpu.memory_space<vmem>>, vector<1x128xf32>
      tpu.vector_store %arg4[%c0_49, %c0_50], %108 {strides = array<i32>} : memref<1x128xf32, #tpu.memory_space<vmem>>, vector<1x128xf32>,
    } else {
    }
    return
  }
  func.func @transform_0(%arg0: i32, %arg1: i32) -> (i32, i32, i32) {
    %c0_i32 = arith.constant 0 : i32
    %c0_i32_0 = arith.constant 0 : i32
    return %c0_i32, %arg1, %arg0 : i32, i32, i32
  }
  func.func @transform_1(%arg0: i32, %arg1: i32) -> (i32, i32, i32) {
    %c0_i32 = arith.constant 0 : i32
    %c0_i32_0 = arith.constant 0 : i32
    return %c0_i32, %arg1, %arg0 : i32, i32, i32
  }
  func.func @transform_2(%arg0: i32, %arg1: i32) -> (i32, i32) {
    %c0_i32 = arith.constant 0 : i32
    %c0_i32_0 = arith.constant 0 : i32
    return %c0_i32, %arg0 : i32, i32
  }
}

</mosaic_0001>

<llo_original>
// kernel: pit_loss.1
$region0: #{pit_loss.1}
  #allocation0 [shape = 'u32[]', space=smem, size = 0x4, offset = 0x4, fixed_abs, tag = 'smem constant byte address 0x4 - core index']
  #allocation1 [shape = 'u32[144,128]{1,0:T(1,128)}', space=vmem, size = 0x12000, scoped, tag = 'internal scratch']
  #allocation2 [shape = 'f32[9,128]{1,0:T(8,128)}', space=vmem, size = 0x2000, scoped, tag = 'scratch operand']
  %s0 = inlined_call_operand.vmem [shape: f32[3,8,128], index: 0, kind: input, shape index: {}]
  %s1 = inlined_call_operand.vmem [shape: f32[3,8,128], index: 1, kind: input, shape index: {}]
  %s2 = inlined_call_operand.vmem [shape: f32[1,128], index: 2, kind: output, shape index: {}]
  %s3 = sld [smem:[#allocation0]]
  $region26: #{pit_loss.1} parent=0
    _
  %s5 = ssub.s32 1, %s3
  %s6 = scalar_select 0, %s5, %s3
  // Predicated region
  $region2: #{pit_loss.1} parent=0 // pred_check
    _
  $region3: #{pit_loss.1} parent=0 // pred_check_branch
    %8 = sbr.rel (0) target = $region5
  $region4: #{pit_loss.1} parent=0 // pred_region
    _
  $region5: #{pit_loss.1} parent=0 // pred_fallthru
    _
  // Predicated region
  $region6: #{pit_loss.1} parent=0 // pred_check
    _
  $region7: #{pit_loss.1} parent=0 // pred_check_branch
    %10 = sbr.rel (0) target = $region9
  $region8: #{pit_loss.1} parent=0 // pred_region
    _
  $region9: #{pit_loss.1} parent=0 // pred_fallthru
    _
  %p11 = scmp.eq.s32.totalorder 0, 0
  // Predicated region
  $region10: #{pit_loss.1} parent=0 // pred_check
    %p12 = pneg %p11
  $region11: #{pit_loss.1} parent=0 // pred_check_branch
    %14 = sbr.rel (%p12) target = $region13
  $region12: #{pit_loss.1} parent=0 // pred_region
    %15 = vst [vmem:[#allocation2] sm:$0xff] 0.0
    %16 = vst [vmem:[#allocation2 + $0x8] sm:$0x1] 0.0
  $region13: #{pit_loss.1} parent=0 // pred_fallthru
    _
  %v17 = vld [vmem:[%s0] sm:$0xff]
  %v18 = vld [vmem:[%s0 + $0x8] sm:$0xff]
  %v19 = vld [vmem:[%s0 + $0x10] sm:$0xff]
  %v20 = vld [vmem:[%s1] sm:$0xff]
  %v21 = vld [vmem:[%s1 + $0x8] sm:$0xff]
  %v22 = vld [vmem:[%s1 + $0x10] sm:$0xff]
  %v23 = vsub.f32 %v17, %v20
  %v24 = vmul.f32 %v23, %v23
  %v25 = vrot.slane %v24, 4
  %v26 = vadd.f32 %v24, %v25
  %v27 = vrot.slane %v26, 2
  %v28 = vadd.f32 %v26, %v27
  %v29 = vrot.slane %v28, 1
  %v30 = vadd.f32 %v28, %v29
  %v31 = vsub.f32 %v17, %v21
  %v32 = vmul.f32 %v31, %v31
  %v33 = vrot.slane %v32, 4
  %v34 = vadd.f32 %v32, %v33
  %v35 = vrot.slane %v34, 2
  %v36 = vadd.f32 %v34, %v35
  %v37 = vrot.slane %v36, 1
  %v38 = vadd.f32 %v36, %v37
  %v39 = vsub.f32 %v17, %v22
  %v40 = vmul.f32 %v39, %v39
  %v41 = vrot.slane %v40, 4
  %v42 = vadd.f32 %v40, %v41
  %v43 = vrot.slane %v42, 2
  %v44 = vadd.f32 %v42, %v43
  %v45 = vrot.slane %v44, 1
  %v46 = vadd.f32 %v44, %v45
  %v47 = vsub.f32 %v18, %v20
  %v48 = vmul.f32 %v47, %v47
  %v49 = vrot.slane %v48, 4
  %v50 = vadd.f32 %v48, %v49
  %v51 = vrot.slane %v50, 2
  %v52 = vadd.f32 %v50, %v51
  %v53 = vrot.slane %v52, 1
  %v54 = vadd.f32 %v52, %v53
  %v55 = vsub.f32 %v18, %v21
  %v56 = vmul.f32 %v55, %v55
  %v57 = vrot.slane %v56, 4
  %v58 = vadd.f32 %v56, %v57
  %v59 = vrot.slane %v58, 2
  %v60 = vadd.f32 %v58, %v59
  %v61 = vrot.slane %v60, 1
  %v62 = vadd.f32 %v60, %v61
  %v63 = vsub.f32 %v18, %v22
  %v64 = vmul.f32 %v63, %v63
  %v65 = vrot.slane %v64, 4
  %v66 = vadd.f32 %v64, %v65
  %v67 = vrot.slane %v66, 2
  %v68 = vadd.f32 %v66, %v67
  %v69 = vrot.slane %v68, 1
  %v70 = vadd.f32 %v68, %v69
  %v71 = vsub.f32 %v19, %v20
  %v72 = vmul.f32 %v71, %v71
  %v73 = vrot.slane %v72, 4
  %v74 = vadd.f32 %v72, %v73
  %v75 = vrot.slane %v74, 2
  %v76 = vadd.f32 %v74, %v75
  %v77 = vrot.slane %v76, 1
  %v78 = vadd.f32 %v76, %v77
  %v79 = vsub.f32 %v19, %v21
  %v80 = vmul.f32 %v79, %v79
  %v81 = vrot.slane %v80, 4
  %v82 = vadd.f32 %v80, %v81
  %v83 = vrot.slane %v82, 2
  %v84 = vadd.f32 %v82, %v83
  %v85 = vrot.slane %v84, 1
  %v86 = vadd.f32 %v84, %v85
  %v87 = vsub.f32 %v19, %v22
  %v88 = vmul.f32 %v87, %v87
  %v89 = vrot.slane %v88, 4
  %v90 = vadd.f32 %v88, %v89
  %v91 = vrot.slane %v90, 2
  %v92 = vadd.f32 %v90, %v91
  %v93 = vrot.slane %v92, 1
  %v94 = vadd.f32 %v92, %v93
  %v95 = vld [vmem:[#allocation2] sm:$0xff]
  %v96 = vld [vmem:[#allocation2 + $0x8] sm:$0x1]
  %vm97 = vcmask 1040384
  %v98 = vsel %vm97, %v30, %v38
  %vm99 = vcmask 1041408
  %v100 = vsel %vm99, %v98, %v46
  %vm101 = vcmask 1042432
  %v102 = vsel %vm101, %v100, %v54
  %vm103 = vcmask 1043456
  %v104 = vsel %vm103, %v102, %v62
  %vm105 = vcmask 1044480
  %v106 = vsel %vm105, %v104, %v70
  %vm107 = vcmask 1045504
  %v108 = vsel %vm107, %v106, %v78
  %vm109 = vcmask 1046528
  %v110 = vsel %vm109, %v108, %v86
  %v111 = vadd.f32 %v95, %v110
  %v112 = vadd.f32 %v96, %v94
  %113 = vst [vmem:[#allocation2] sm:$0xff] %v111
  %114 = vst [vmem:[#allocation2 + $0x8] sm:$0x1] %v112
  // Predicated region
  $region14: #{pit_loss.1} parent=0 // pred_check
    %p115 = pneg %p11
  $region15: #{pit_loss.1} parent=0 // pred_check_branch
    %117 = sbr.rel (%p115) target = $region17
  $region16: #{pit_loss.1} parent=0 // pred_region
    %v118 = vld [vmem:[#allocation2] sm:$0x1]
    %v119 = vld [vmem:[#allocation2 + $0x4] sm:$0x1]
    %v120 = vadd.f32 %v118, %v119
    %v121 = vld [vmem:[#allocation2 + $0x8] sm:$0x1]
    %v122 = vadd.f32 %v120, %v121
    %v123 = vld [vmem:[#allocation2 + $0x7] sm:$0x1]
    %v124 = vadd.f32 %v118, %v123
    %v125 = vld [vmem:[#allocation2 + $0x5] sm:$0x1]
    %v126 = vadd.f32 %v124, %v125
    %v127 = vmin.f32 %v122, %v126
    %v128 = vld [vmem:[#allocation2 + $0x3] sm:$0x1]
    %v129 = vld [vmem:[#allocation2 + $0x1] sm:$0x1]
    %v130 = vadd.f32 %v128, %v129
    %v131 = vadd.f32 %v130, %v121
    %v132 = vmin.f32 %v127, %v131
    %v133 = vadd.f32 %v128, %v123
    %v134 = vld [vmem:[#allocation2 + $0x2] sm:$0x1]
    %v135 = vadd.f32 %v133, %v134
    %v136 = vmin.f32 %v132, %v135
    %v137 = vld [vmem:[#allocation2 + $0x6] sm:$0x1]
    %v138 = vadd.f32 %v137, %v129
    %v139 = vadd.f32 %v138, %v125
    %v140 = vmin.f32 %v136, %v139
    %v141 = vadd.f32 %v137, %v119
    %v142 = vadd.f32 %v141, %v134
    %v143 = vmin.f32 %v140, %v142
    %v144 = vmul.f32 %v143, 0.041666668
    %145 = vst [vmem:[%s2] sm:$0x1] %v144
  $region17: #{pit_loss.1} parent=0 // pred_fallthru
    _
  // Predicated region
  $region18: #{pit_loss.1} parent=0 // pred_check
    _
  $region19: #{pit_loss.1} parent=0 // pred_check_branch
    %147 = sbr.rel (0) target = $region21
  $region20: #{pit_loss.1} parent=0 // pred_region
    _
  $region21: #{pit_loss.1} parent=0 // pred_fallthru
    _
  // Predicated region
  $region22: #{pit_loss.1} parent=0 // pred_check
    _
  $region23: #{pit_loss.1} parent=0 // pred_check_branch
    %149 = sbr.rel (0) target = $region25
  $region24: #{pit_loss.1} parent=0 // pred_region
    _
  $region25: #{pit_loss.1} parent=0 // pred_fallthru
    _

</llo_original>
